<compile_context>
chip_gen: v7x
topology: tpu7x:2x2x1
jax: 0.10.0
libtpu: 0.0.40
codegen_flags: <defaults>
</compile_context>

<pallas_src>
import jax
import jax.numpy as jnp
from jax.experimental import pallas as pl
from jax.experimental.pallas import tpu as pltpu

_LANE = 128
_MAX_ROW_TILE = 2048  # measured: >=512 rows already ~85% of HBM roofline


def _round_down(x, m):
    return (x // m) * m


def _sublane_align(dtype):
    # Sub-32-bit dtypes pack along sublanes: bf16 vreg is (16,128), int8 (32,128).
    return {4: 8, 2: 16, 1: 32}.get(jnp.dtype(dtype).itemsize, 8)


def _vmem_budget_bytes():
    # ~75% of per-core VMEM; leave headroom for compiler-internal scratch.
    try:
        phys = int(pltpu.get_tpu_info().vmem_capacity_bytes)
        if phys < (16 << 20):
            phys = 64 << 20
    except Exception:
        phys = 64 << 20  # v7x per-TC VMEM, the smallest current generation
    return (phys * 3) // 4


def _pick_row_tile(m, per_row_bytes, resident_bytes, budget, align):
    if m <= 4 * align:
        return m  # tiny: single full block (full-dim escape hatch)
    tm = max(budget - resident_bytes, 0) // max(per_row_bytes, 1)
    tm = _round_down(int(tm), align)
    # >= 4 grid steps: DMA/compute overlap, and >= 2 steps per v7x TensorCore.
    tm = min(tm, _MAX_ROW_TILE, _round_down(m // 4, align))
    return max(align, tm)


def _value_head_c1_kernel(b_ref, x_ref, w_ref, o_ref):
    # C == 1: skip the degenerate 1-column MXU matmul; VPU multiply + lane
    # reduce. Product stays in the activation dtype (no full-tile f32 upcast
    # for bf16); accumulation and bias/tanh are f32.
    prod = (x_ref[...] * w_ref[...]).astype(jnp.float32)        # (tm, H)
    y = jnp.sum(prod, axis=-1, keepdims=True) + b_ref[0]         # SMEM scalar bias
    o_ref[...] = jnp.tanh(y).astype(o_ref.dtype)


def _value_head_dot_kernel(x_ref, w_ref, b_ref, o_ref):
    # General-C path: MXU matmul (activation-dtype operands, f32 accumulation),
    # fused bias + tanh, downcast on store.
    y = jnp.dot(x_ref[...], w_ref[...], preferred_element_type=jnp.float32)
    y = y + b_ref[...].astype(jnp.float32)
    o_ref[...] = jnp.tanh(y).astype(o_ref.dtype)


def value_head_forward(hidden_states, weight, bias, *, w_t=None, use_pallas=None):
    """ValueHead forward: tanh(hidden_states @ weight.T + bias).

    hidden_states: [B, S, H] (f32 or bf16); weight: [C, H] (nn.Linear layout);
    bias: [C]. Optional w_t: pre-transposed [H, C] weight (hoists the per-call
    transpose/cast out of the forward). Returns [B, S, C] in activation dtype.
    """
    B, S, H = hidden_states.shape
    C = weight.shape[0]
    assert weight.shape == (C, H), (weight.shape, (C, H))
    assert bias.shape == (C,), bias.shape
    M = B * S
    x_dtype = hidden_states.dtype
    x_item = jnp.dtype(x_dtype).itemsize
    out_item = x_item

    if use_pallas is None:
        # Tiny slabs: pallas_call fixed overhead dominates; let XLA fuse it.
        use_pallas = (M * H) >= (1 << 18)
    if not use_pallas:
        return jnp.tanh(
            jnp.einsum("bsh,ch->bsc", hidden_states, weight) + bias
        ).astype(x_dtype)

    x2d = hidden_states.reshape(M, H)
    # Weight operands match the activation dtype: bf16 in -> bf16 MXU/VPU
    # operands (no in-kernel upcast of the whole tile, half the resident
    # weight); f32 in -> full f32 precision (matches the reference exactly).
    w_dtype = x_dtype
    w_item = jnp.dtype(w_dtype).itemsize

    budget = _vmem_budget_bytes()
    align = _sublane_align(x_dtype)

    cost = pl.CostEstimate(
        flops=2 * M * H * C,
        transcendentals=M * C,
        bytes_accessed=M * H * x_item + H * C * w_item + M * C * out_item,
    )

    if C == 1:
        resident = 2 * H * w_item                   # (1, H) weight row, 2x buffered
        per_row = 2 * (H * x_item + out_item)       # x + out double buffers
        tm = _pick_row_tile(M, per_row, resident, budget, align)
        grid = (pl.cdiv(M, tm),)
        out2d = pl.pallas_call(
            _value_head_c1_kernel,
            out_shape=jax.ShapeDtypeStruct((M, 1), x_dtype),
            grid_spec=pltpu.PrefetchScalarGridSpec(
                num_scalar_prefetch=0,
                grid=grid,
                in_specs=[
                    # Scalar bias in SMEM: no padded (8,128) VMEM tile / DMA.
                    pl.BlockSpec(memory_space=pltpu.MemorySpace.SMEM),
                    pl.BlockSpec((tm, H), lambda i: (i, 0)),   # activations
                    pl.BlockSpec((1, H), lambda i: (0, 0)),    # weight row, resident
                ],
                out_specs=pl.BlockSpec((tm, 1), lambda i: (i, 0)),
            ),
            compiler_params=pltpu.CompilerParams(
                dimension_semantics=("parallel",),
                vmem_limit_bytes=budget,
            ),
            cost_estimate=cost,
        )(bias.astype(jnp.float32), x2d, weight.astype(w_dtype))
        return out2d.reshape(B, S, 1)

    # --- General C (e.g. projection back to hidden_size) ---
    w_t_arr = (weight.T if w_t is None else w_t).astype(w_dtype)   # (H, C)
    assert w_t_arr.shape == (H, C), w_t_arr.shape
    b2d = bias.reshape(1, C).astype(jnp.float32)

    # Bound the resident-weight footprint (v7x: 64 MiB VMEM per TC): give the
    # (double-buffered) weight at most ~40% of the budget; if the full (H, C)
    # slab does not fit, tile C into lane-aligned (H, tn) slabs.
    w_budget = (2 * budget) // 5
    tn_fit = _round_down(w_budget // max(2 * H * w_item, 1), _LANE)
    tn = C if (C <= _LANE or tn_fit >= C) else max(_LANE, tn_fit)

    resident = 2 * (H * tn * w_item + tn * 4)       # weight slab + f32 bias slab
    per_row = 2 * (H * x_item + tn * out_item)      # x + out double buffers
    tm = _pick_row_tile(M, per_row, resident, budget, align)
    n_m = pl.cdiv(M, tm)

    if tn >= C:
        grid = (n_m,)
        in_specs = [
            pl.BlockSpec((tm, H), lambda i: (i, 0)),    # activations (pipelined)
            pl.BlockSpec((H, C), lambda i: (0, 0)),     # weight, VMEM-resident
            pl.BlockSpec((1, C), lambda i: (0, 0)),     # bias, VMEM-resident
        ]
        out_specs = pl.BlockSpec((tm, C), lambda i: (i, 0))
        dims = ("parallel",)
    else:
        # C on the OUTER axis: each weight slab is DMA'd once and stays
        # resident while the inner row axis sweeps; activations are re-read
        # only C/tn times (weight re-reads would scale with M/tm instead).
        n_c = pl.cdiv(C, tn)
        grid = (n_c, n_m)
        in_specs = [
            pl.BlockSpec((tm, H), lambda j, i: (i, 0)),
            pl.BlockSpec((H, tn), lambda j, i: (0, j)),
            pl.BlockSpec((1, tn), lambda j, i: (0, j)),
        ]
        out_specs = pl.BlockSpec((tm, tn), lambda j, i: (i, j))
        dims = ("parallel", "parallel")

    out2d = pl.pallas_call(
        _value_head_dot_kernel,
        out_shape=jax.ShapeDtypeStruct((M, C), x_dtype),
        grid_spec=pltpu.PrefetchScalarGridSpec(
            num_scalar_prefetch=0,
            grid=grid,
            in_specs=in_specs,
            out_specs=out_specs,
        ),
        compiler_params=pltpu.CompilerParams(
            dimension_semantics=dims,
            vmem_limit_bytes=budget,
        ),
        cost_estimate=cost,
    )(x2d, w_t_arr, b2d)
    return out2d.reshape(B, S, C)


if __name__ == "__main__":
    # Small shapes consistent with the module: batch=2, seq=8, hidden=32.
    B, S, H = 2, 8, 32
    key = jax.random.PRNGKey(0)
    k_x, k_w1, k_b1, k_w2, k_b2 = jax.random.split(key, 5)

    hidden_states = jax.random.normal(k_x, (B, S, H), dtype=jnp.float32)

    # Path 1: summary_proj_to_labels=True, num_labels=1 (typical value head).
    C1 = 1
    w1 = jax.random.normal(k_w1, (C1, H), dtype=jnp.float32) * 0.02
    b1 = jax.random.normal(k_b1, (C1,), dtype=jnp.float32) * 0.02
    out1 = jax.block_until_ready(value_head_forward(hidden_states, w1, b1, use_pallas=True))
    ref1 = jnp.tanh(jnp.einsum("bsh,ch->bsc", hidden_states, w1) + b1)
    assert out1.shape == (B, S, C1)
    assert jnp.allclose(out1, ref1, atol=1e-5, rtol=1e-5)

    # Path 2: projection back to hidden_size (summary_proj_to_labels=False).
    C2 = H
    w2 = jax.random.normal(k_w2, (C2, H), dtype=jnp.float32) * 0.02
    b2 = jax.random.normal(k_b2, (C2,), dtype=jnp.float32) * 0.02
    out2 = jax.block_until_ready(value_head_forward(hidden_states, w2, b2, use_pallas=True))
    ref2 = jnp.tanh(jnp.einsum("bsh,ch->bsc", hidden_states, w2) + b2)
    assert out2.shape == (B, S, C2)
    assert jnp.allclose(out2, ref2, atol=1e-5, rtol=1e-5)

    # Path 3: non-divisible M -> multi-step grid with a masked boundary block.
    B3, S3 = 2, 50  # M = 100 -> tm = 24, 5 grid steps, partial last block
    x3 = jax.random.normal(jax.random.PRNGKey(1), (B3, S3, H), dtype=jnp.float32)
    out3 = jax.block_until_ready(value_head_forward(x3, w2, b2, use_pallas=True))
    ref3 = jnp.tanh(jnp.einsum("bsh,ch->bsc", x3, w2) + b2)
    assert out3.shape == (B3, S3, C2)
    assert jnp.allclose(out3, ref3, atol=1e-5, rtol=1e-5)

    # Path 4: bf16 activations (native bf16 MXU operands, f32 accumulation).
    xb = hidden_states.astype(jnp.bfloat16)
    out4 = jax.block_until_ready(value_head_forward(xb, w2, b2, use_pallas=True))
    ref4 = jnp.tanh(jnp.einsum("bsh,ch->bsc", xb.astype(jnp.float32), w2) + b2)
    assert out4.shape == (B, S, C2)
    assert jnp.allclose(out4.astype(jnp.float32), ref4, atol=2e-2, rtol=2e-2)

    print("KERNEL_OK")
</pallas_src>

<mosaic_0001>
module attributes {stable_mosaic.version = 11 : i64} {
  func.func @_value_head_c1_kernel(%arg0: i32, %arg1: memref<1xf32, #tpu.memory_space<smem>>, %arg2: memref<16x32xf32, #tpu.memory_space<vmem>>, %arg3: memref<1x32xf32, #tpu.memory_space<vmem>>, %arg4: memref<16x1xf32, #tpu.memory_space<vmem>>) attributes {dimension_semantics = [#tpu.dimension_semantics<parallel>], iteration_bounds = array<i64: 1>, scalar_prefetch = 0 : i64, scratch_operands = 0 : i64, tpu.core_type = #tpu.core_type<tc>, window_params = [{transform_indices = @transform_0, window_bounds = array<i64: 1>}, {transform_indices = @transform_1, window_bounds = array<i64: 16, 32>}, {pipeline_mode = #tpu.pipeline_mode<synchronous>, transform_indices = @transform_2, window_bounds = array<i64: 1, 32>}, {transform_indices = @transform_3, window_bounds = array<i64: 16, 1>}]} {
    %c0 = arith.constant 0 : index
    %c0_0 = arith.constant 0 : index
    %0 = vector.load %arg2[%c0, %c0_0] : memref<16x32xf32, #tpu.memory_space<vmem>>, vector<16x32xf32>
    %c0_1 = arith.constant 0 : index
    %c0_2 = arith.constant 0 : index
    %1 = vector.load %arg3[%c0_1, %c0_2] : memref<1x32xf32, #tpu.memory_space<vmem>>, vector<1x32xf32>
    %2 = vector.broadcast %1 : vector<1x32xf32> to vector<16x32xf32>
    %3 = arith.mulf %0, %2 : vector<16x32xf32>
    %cst = arith.constant dense<0.000000e+00> : vector<16xf32>
    %4 = vector.multi_reduction <add>, %3, %cst [1] : vector<16x32xf32> to vector<16xf32>
    %5 = vector.shape_cast %4 : vector<16xf32> to vector<16x1xf32>
    %c0_3 = arith.constant 0 : index
    %6 = memref.load %arg1[%c0_3] : memref<1xf32, #tpu.memory_space<smem>>
    %7 = vector.broadcast %6 : f32 to vector<16x1xf32>
    %8 = arith.addf %5, %7 : vector<16x1xf32>
    %9 = math.tanh %8 : vector<16x1xf32>
    %c0_4 = arith.constant 0 : index
    %c0_5 = arith.constant 0 : index
    %10 = vector.load %arg4[%c0_4, %c0_5] : memref<16x1xf32, #tpu.memory_space<vmem>>, vector<16x1xf32>
    tpu.vector_store %arg4[%c0_4, %c0_5], %9 {strides = array<i32>} : memref<16x1xf32, #tpu.memory_space<vmem>>, vector<16x1xf32>,
    return
  }
  func.func @transform_0(%arg0: i32) -> i32 {
    %c0_i32 = arith.constant 0 : i32
    %c0_i32_0 = arith.constant 0 : i32
    return %c0_i32 : i32
  }
  func.func @transform_1(%arg0: i32) -> (i32, i32) {
    %c0_i32 = arith.constant 0 : i32
    %c0_i32_0 = arith.constant 0 : i32
    return %arg0, %c0_i32 : i32, i32
  }
  func.func @transform_2(%arg0: i32) -> (i32, i32) {
    %c0_i32 = arith.constant 0 : i32
    %c0_i32_0 = arith.constant 0 : i32
    %c0_i32_1 = arith.constant 0 : i32
    return %c0_i32, %c0_i32_0 : i32, i32
  }
  func.func @transform_3(%arg0: i32) -> (i32, i32) {
    %c0_i32 = arith.constant 0 : i32
    %c0_i32_0 = arith.constant 0 : i32
    return %arg0, %c0_i32 : i32, i32
  }
}

</mosaic_0001>

<llo_original>
// kernel: tpu_custom_call.1
$region0: #{tpu_custom_call.1}
  #allocation0 [shape = 'u32[]', space=smem, size = 0x4, offset = 0x4, fixed_abs, tag = 'smem constant byte address 0x4 - core index']
  #allocation1 [shape = 'u32[144,128]{1,0:T(1,128)}', space=vmem, size = 0x12000, scoped, tag = 'internal scratch']
  #allocation2 [shape = 'f32[1]{0:T(128)S(6)}', space=smem, size = 0x200, scoped, tag = 'scoped memory for tpu_custom_call.1']
  %s0 = inlined_call_operand.<no memory space> [shape: f32[1], index: 0, kind: input, shape index: {}]
  %s1 = inlined_call_operand.hbm [shape: f32[16,32], index: 1, kind: input, shape index: {}]
  %s2 = inlined_call_operand.vmem [shape: f32[1,32], index: 2, kind: input, shape index: {}]
  %s3 = inlined_call_operand.vmem [shape: f32[16,1], index: 3, kind: output, shape index: {}]
  %s4 = sld [smem:[#allocation0]]
  $region26: #{tpu_custom_call.1} parent=0
    _
  %s6 = ssub.s32 1, %s4
  %s7 = scalar_select 0, %s6, %s4
  %8 = sst [smem:[#allocation2]] %s0
  $region1: #{tpu_custom_call.1} parent=0
    #allocation3 [shape = 'u8[8192]{0}', space=vmem, size = 0x2000, scoped, tag = 'input window, operand 1, single buffered']
    #allocation4 [shape = 's32[1]{0}', space=sflag, size = 0x4, scoped, tag = 'scoped memory for tpu_custom_call.1']
    %9 = vsyncpa [#allocation4], 0
    // Predicated region
    $region2: #{tpu_custom_call.1} parent=1 // pred_check
      _
    $region3: #{tpu_custom_call.1} parent=1 // pred_check_branch
      %11 = sbr.rel (0) target = $region5
    $region4: #{tpu_custom_call.1} parent=1 // pred_region
      _
    $region5: #{tpu_custom_call.1} parent=1 // pred_fallthru
      _
    // Predicated region
    $region6: #{tpu_custom_call.1} parent=1 // pred_check
      _
    $region7: #{tpu_custom_call.1} parent=1 // pred_check_branch
      %13 = sbr.rel (0) target = $region9
    $region8: #{tpu_custom_call.1} parent=1 // pred_region
      %s15 = ssub.s32 256, 256
      %16 = vsyncadd [#allocation4], %s15
      %s17 = sshll.u32 [#allocation3], 4
      %s18 = int_to_ptr.vmem [resolvable:$true] %s17
      %23 = dma.hbm_to_vmem [thread:$0]  %s1, 256, %s18, [#allocation4], 128, 128, 8
    $region9: #{tpu_custom_call.1} parent=1 // pred_fallthru
      _
    // Predicated region
    $region10: #{tpu_custom_call.1} parent=1 // pred_check
      _
    $region11: #{tpu_custom_call.1} parent=1 // pred_check_branch
      %25 = sbr.rel (0) target = $region13
    $region12: #{tpu_custom_call.1} parent=1 // pred_region
      _
    $region13: #{tpu_custom_call.1} parent=1 // pred_fallthru
      _
    // Predicated region
    $region14: #{tpu_custom_call.1} parent=1 // pred_check
      _
    $region15: #{tpu_custom_call.1} parent=1 // pred_check_branch
      %27 = sbr.rel (0) target = $region17
    $region16: #{tpu_custom_call.1} parent=1 // pred_region
      %28 = dma.done [#allocation4], 256
    $region17: #{tpu_custom_call.1} parent=1 // pred_fallthru
      _
    %v29 = vld [vmem:[#allocation3] sm:$0xff]
    %v30 = vld [vmem:[#allocation3 + $0x8] sm:$0xff]
    %v31 = vld [vmem:[%s2] sm:$0x1]
    %v33 = vlaneseq
    %v34 = vshrl.u32 %v33, 7
    %v35 = vsub.s32 0, %v34
    %v36 = vrot.slane %v31, %v35
    %v38 = vmul.f32 %v29, %v36
    %v39 = vmul.f32 %v30, %v36
    %vm40 = vcmask 261120
    %v41 = vsel %vm40, %v38, 0.0
    %42 = vadd.xlane.f32.xlu0 %v41
    %v43 = vpop.xlane.xlu0 %42
    %v44 = vsel %vm40, %v39, 0.0
    %45 = vadd.xlane.f32.xlu0 %v44
    %v46 = vpop.xlane.xlu0 %45
    %s47 = sld [smem:[#allocation2]]
    %v48 = vstv %s47
    %v49 = vadd.f32 %v43, %v48
    %v50 = vadd.f32 %v46, %v48
    %v51 = vtanh.pop %v49
    %v52 = vtanh.pop %v50
    %vm53 = vcmask 7168
    %54 = vst.msk [vmem:[%s3] sm:$0xff] %vm53, %v51
    %55 = vst.msk [vmem:[%s3 + $0x8] sm:$0xff] %vm53, %v52
    // Predicated region
    $region18: #{tpu_custom_call.1} parent=1 // pred_check
      _
    $region19: #{tpu_custom_call.1} parent=1 // pred_check_branch
      %57 = sbr.rel (0) target = $region21
    $region20: #{tpu_custom_call.1} parent=1 // pred_region
      _
    $region21: #{tpu_custom_call.1} parent=1 // pred_fallthru
      _
    // Predicated region
    $region22: #{tpu_custom_call.1} parent=1 // pred_check
      _
    $region23: #{tpu_custom_call.1} parent=1 // pred_check_branch
      %59 = sbr.rel (0) target = $region25
    $region24: #{tpu_custom_call.1} parent=1 // pred_region
      _
    $region25: #{tpu_custom_call.1} parent=1 // pred_fallthru
      _
    %60 = vsyncpa [#allocation4], 1

</llo_original>
